<compile_context>
chip_gen: v7x
topology: tpu7x:2x2x1
jax: 0.10.0
libtpu: 0.0.40
codegen_flags: <defaults>
</compile_context>

<pallas_src>
import math
import functools

import jax
import jax.numpy as jnp
from jax import lax
from jax.experimental import pallas as pl
from jax.experimental.pallas import tpu as pltpu

SELU_ALPHA = 1.6732632423543772
SELU_SCALE = 1.0507009873554805
# NOTE: the torch source hardcodes sqrt(512) regardless of hidden_size; kept
# for parity.
INV_SQRT_512 = 1.0 / math.sqrt(512.0)


def _selu(x):
    return SELU_SCALE * jnp.where(x > 0, x, SELU_ALPHA * (jnp.exp(x) - 1.0))


# ----------------------------- VMEM budgeting --------------------------------


@functools.lru_cache(maxsize=None)
def _vmem_limit_bytes():
    """Scoped-VMEM limit: ~100 MiB on v5e/v6e (128 MiB physical), ~54 MiB on v7x."""
    try:
        cap = int(pltpu.get_tpu_info().vmem_capacity_bytes)
    except Exception:
        cap = 64 * 1024 * 1024  # conservative fallback (v7x physical VMEM)
    return min(int(cap * 0.85), 100 * 1024 * 1024)


def _tile_budget_bytes():
    # Leave headroom inside the scoped limit for compiler-internal scratch.
    return int(_vmem_limit_bytes() * 0.85)


def _param_bytes(H):
    # 5 (H,H) weights + 4 (1,H) biases, double-buffered by the pipeline.
    return 4 * 2 * (5 * H * H + 4 * H)


def _largest_divisor_leq(n, cap):
    cap = max(int(cap), 1)
    best = 1
    for t in range(1, n + 1):
        if n % t == 0 and t <= cap:
            best = t
    return best


def _pick_tq(S, H):
    """Query tile (selfatt): largest divisor of S fitting the VMEM budget."""
    budget = _tile_budget_bytes()
    fixed = 4 * (2 * S * H      # (1,S,H) ctx block, double-buffered
                 + S * H) \
        + _param_bytes(H)       # gamma_enc key cache + params
    per_q = 4 * (2 * H + 2 * S  # (1,tq,H) out and (1,tq,S) w blocks, x2 buffers
                 + 4 * S + 4 * H)  # score / softmax / c_t / y temporaries
    avail = max(budget - fixed, per_q)
    cap = min(avail // per_q, 512, S)
    return _largest_divisor_leq(S, cap)


def _pick_tb(B, S, H):
    """Batch-rows-per-block (crossatt): largest divisor of B fitting VMEM."""
    budget = _tile_budget_bytes()
    fixed = _param_bytes(H)
    per_b = 4 * (2 * S * H          # (tb,S,H) ctx block, double-buffered (dominant)
                 + 4 * H + 2 * S    # h / out / w blocks
                 + 3 * S + 4 * H)   # score / softmax / c_t / y temporaries
    avail = max(budget - fixed, per_b)
    cap = min(avail // per_b, 256, B)
    return _largest_divisor_leq(B, cap)


# ------------------------------ kernels ---------------------------------------


def _selfatt_kernel(ctx_ref,
                    we1_ref, be1_ref, we2_ref, be2_ref,
                    wo1g_ref, wo1c_ref, bo1_ref, wo2_ref, bo2_ref,
                    out_ref, w_ref,
                    gk_ref, *, tq):
    """Grid (B, S//tq).  ctx block: (1,S,H); out block: (1,tq,H); w: (1,tq,S)."""
    q = pl.program_id(1)

    # Build the per-batch key/value cache once per batch (q == 0):
    # gamma_enc = linear_enc(context), kept resident for every query tile.
    @pl.when(q == 0)
    def _():
        ctx = ctx_ref[0]                                            # (S, H)
        g = _selu(jnp.dot(ctx, we1_ref[...],
                          preferred_element_type=jnp.float32) + be1_ref[...])
        g = _selu(jnp.dot(g, we2_ref[...],
                          preferred_element_type=jnp.float32) + be2_ref[...])
        gk_ref[...] = g                                             # (S, H)

    row0 = pl.multiple_of(q * tq, tq)
    gamma_q = gk_ref[pl.ds(row0, tq), :]                            # (tq, H)
    ctx_q = ctx_ref[0, pl.ds(row0, tq), :]                          # (tq, H)

    # NT score matmul against the resident key cache (no (H,S) transpose
    # scratch); the 1/sqrt(512) scale is folded into the small (tq,H) LHS.
    scores = lax.dot_general(gamma_q * INV_SQRT_512, gk_ref[...],
                             dimension_numbers=(((1,), (1,)), ((), ())),
                             preferred_element_type=jnp.float32)    # (tq, S)
    m = jnp.max(scores, axis=-1, keepdims=True)
    p = jnp.exp(scores - m)
    # Exact normalisation: `w` is a user-visible output, approx reciprocal is
    # too lossy for parity with torch softmax.
    w = p * (1.0 / jnp.sum(p, axis=-1, keepdims=True))

    c_t = jnp.dot(w, gk_ref[...], preferred_element_type=jnp.float32)  # (tq, H)

    # linear_out on [gamma_q ; c_t] without materialising the (tq, 2H) concat.
    y = _selu(jnp.dot(gamma_q, wo1g_ref[...], preferred_element_type=jnp.float32)
              + jnp.dot(c_t, wo1c_ref[...], preferred_element_type=jnp.float32)
              + bo1_ref[...])
    y = _selu(jnp.dot(y, wo2_ref[...], preferred_element_type=jnp.float32)
              + bo2_ref[...])

    out_ref[0] = y + ctx_q                                          # residual
    w_ref[0] = w


def _crossatt_kernel(h_ref, ctx_ref,
                     wi1_ref, bi1_ref, wi2_ref, bi2_ref,
                     wo1h_ref, wo1c_ref, bo1_ref, wo2_ref, bo2_ref,
                     out_ref, w_ref):
    """Grid (B//TB,).  h block: (TB,H); ctx block: (TB,S,H)."""
    h = h_ref[...]                                                  # (TB, H)
    ctx = ctx_ref[...]                                              # (TB, S, H)

    g = _selu(jnp.dot(h, wi1_ref[...],
                      preferred_element_type=jnp.float32) + bi1_ref[...])
    g = _selu(jnp.dot(g, wi2_ref[...],
                      preferred_element_type=jnp.float32) + bi2_ref[...])  # (TB,H)

    # Batched per-row attention as MXU contractions (singleton query dim):
    # avoids (TB,S,H) elementwise temporaries and cross-lane reductions.
    g3 = g[:, None, :]                                              # (TB, 1, H)
    s3 = jnp.einsum("bqh,bsh->bqs", g3, ctx,
                    preferred_element_type=jnp.float32)             # (TB, 1, S)
    m = jnp.max(s3, axis=-1, keepdims=True)
    p = jnp.exp(s3 - m)
    w3 = p * (1.0 / jnp.sum(p, axis=-1, keepdims=True))             # (TB, 1, S)
    c3 = jnp.einsum("bqs,bsh->bqh", w3, ctx,
                    preferred_element_type=jnp.float32)             # (TB, 1, H)
    c_t = c3[:, 0, :]                                               # (TB, H)

    # linear_out on [h ; c_t] without the (TB, 2H) concat.
    y = _selu(jnp.dot(h, wo1h_ref[...], preferred_element_type=jnp.float32)
              + jnp.dot(c_t, wo1c_ref[...], preferred_element_type=jnp.float32)
              + bo1_ref[...])
    y = _selu(jnp.dot(y, wo2_ref[...], preferred_element_type=jnp.float32)
              + bo2_ref[...])

    out_ref[...] = y
    w_ref[...] = w3[:, 0, :]


# ------------------------------ wrappers --------------------------------------


def _rep_spec(shape):
    """Full-array BlockSpec replicated over every grid point."""
    zeros = (0,) * len(shape)
    return pl.BlockSpec(shape, lambda *args, _z=zeros: _z)


@functools.partial(jax.jit, static_argnames=("selfatt", "tile_q"))
def luong_gate_attention_forward(h, context, params, selfatt=False, tile_q=None):
    """params: dict of (in,out)-layout weights + (1,out) biases."""
    B, S, H = context.shape
    vmem_limit = _vmem_limit_bytes()

    if selfatt:
        tq = _pick_tq(S, H) if tile_q is None else tile_q
        assert S % tq == 0
        nq = S // tq

        enc = (params["we1"], params["be1"], params["we2"], params["be2"])
        wo1 = params["wo1"]
        wo1_g, wo1_c = wo1[:H], wo1[H:]          # split: kills the (.,2H) concat
        outp = (wo1_g, wo1_c, params["bo1"], params["wo2"], params["bo2"])
        param_inputs = (*enc, *outp)
        param_specs = [_rep_spec(p.shape) for p in param_inputs]

        out, w = pl.pallas_call(
            functools.partial(_selfatt_kernel, tq=tq),
            out_shape=(jax.ShapeDtypeStruct((B, S, H), jnp.float32),
                       jax.ShapeDtypeStruct((B, S, S), jnp.float32)),
            grid_spec=pltpu.PrefetchScalarGridSpec(
                num_scalar_prefetch=0,
                grid=(B, nq),
                in_specs=[pl.BlockSpec((1, S, H), lambda b, q: (b, 0, 0))]
                + param_specs,
                out_specs=[pl.BlockSpec((1, tq, H), lambda b, q: (b, q, 0)),
                           pl.BlockSpec((1, tq, S), lambda b, q: (b, q, 0))],
                scratch_shapes=[pltpu.VMEM((S, H), jnp.float32)],  # gamma_enc cache
            ),
            compiler_params=pltpu.CompilerParams(
                dimension_semantics=("parallel", "arbitrary"),
                vmem_limit_bytes=vmem_limit),
        )(context, *param_inputs)
        # torch glue: output.transpose(0, 1) -> (S, B, H)
        out = jnp.transpose(out, (1, 0, 2))
        return out, w
    else:
        tb = _pick_tb(B, S, H)
        assert B % tb == 0
        nb = B // tb

        lin_in = (params["wi1"], params["bi1"], params["wi2"], params["bi2"])
        wo1 = params["wo1"]
        wo1_h, wo1_c = wo1[:H], wo1[H:]
        outp = (wo1_h, wo1_c, params["bo1"], params["wo2"], params["bo2"])
        param_inputs = (*lin_in, *outp)
        param_specs = [_rep_spec(p.shape) for p in param_inputs]

        out, w = pl.pallas_call(
            _crossatt_kernel,
            out_shape=(jax.ShapeDtypeStruct((B, H), jnp.float32),
                       jax.ShapeDtypeStruct((B, S), jnp.float32)),
            grid_spec=pltpu.PrefetchScalarGridSpec(
                num_scalar_prefetch=0,
                grid=(nb,),
                in_specs=[pl.BlockSpec((tb, H), lambda i: (i, 0)),
                          pl.BlockSpec((tb, S, H), lambda i: (i, 0, 0))]
                + param_specs,
                out_specs=[pl.BlockSpec((tb, H), lambda i: (i, 0)),
                           pl.BlockSpec((tb, S), lambda i: (i, 0))],
            ),
            compiler_params=pltpu.CompilerParams(
                dimension_semantics=("parallel",),
                vmem_limit_bytes=vmem_limit),
        )(h, context, *param_inputs)
        return out, w


# ------------------------- params / reference ---------------------------------


def init_params(key, hidden):
    """Deterministic PyTorch-style uniform init; weights stored (in, out)."""
    def linear(k, fan_in, fan_out):
        kw, kb = jax.random.split(k)
        bound = 1.0 / math.sqrt(fan_in)
        w = jax.random.uniform(kw, (fan_in, fan_out), jnp.float32, -bound, bound)
        b = jax.random.uniform(kb, (1, fan_out), jnp.float32, -bound, bound)
        return w, b

    keys = jax.random.split(key, 6)
    we1, be1 = linear(keys[0], hidden, hidden)
    we2, be2 = linear(keys[1], hidden, hidden)
    wi1, bi1 = linear(keys[2], hidden, hidden)
    wi2, bi2 = linear(keys[3], hidden, hidden)
    wo1, bo1 = linear(keys[4], 2 * hidden, hidden)
    wo2, bo2 = linear(keys[5], hidden, hidden)
    return dict(we1=we1, be1=be1, we2=we2, be2=be2,
                wi1=wi1, bi1=bi1, wi2=wi2, bi2=bi2,
                wo1=wo1, bo1=bo1, wo2=wo2, bo2=bo2)


def _mlp2_ref(x, w1, b1, w2, b2):
    y = _selu(jnp.dot(x, w1) + b1)
    y = _selu(jnp.dot(y, w2) + b2)
    return y


def _ref_forward(h, context, params, selfatt):
    """Pure-JAX reference mirroring the torch forward (dropout = identity)."""
    enc = lambda x: _mlp2_ref(x, params["we1"], params["be1"],
                              params["we2"], params["be2"])
    lin_in = lambda x: _mlp2_ref(x, params["wi1"], params["bi1"],
                                 params["wi2"], params["bi2"])
    lin_out = lambda x: _mlp2_ref(x, params["wo1"], params["bo1"],
                                  params["wo2"], params["bo2"])
    if selfatt:
        g = enc(context)                                        # (B,S,H)
        scores = jnp.einsum("bsh,bth->bst", g, g) / math.sqrt(512.0)
        w = jax.nn.softmax(scores, axis=-1)
        c_t = jnp.einsum("bst,bth->bsh", w, g)
        out = lin_out(jnp.concatenate([g, c_t], axis=2)) + context
        return jnp.transpose(out, (1, 0, 2)), w
    else:
        gamma_h = lin_in(h)                                     # (B,H)
        scores = jnp.einsum("bsh,bh->bs", context, gamma_h)
        w = jax.nn.softmax(scores, axis=-1)
        c_t = jnp.einsum("bs,bsh->bh", w, context)
        out = lin_out(jnp.concatenate([h, c_t], axis=1))
        return out, w


if __name__ == "__main__":
    B, S, H = 2, 8, 32
    key = jax.random.PRNGKey(0)
    k_h, k_ctx, k_p = jax.random.split(key, 3)

    h = jax.random.normal(k_h, (B, H), jnp.float32)
    context = jax.random.normal(k_ctx, (B, S, H), jnp.float32)
    params = init_params(k_p, H)

    # cross-attention branch (selfatt=False)
    out0, w0 = luong_gate_attention_forward(h, context, params, selfatt=False)
    out0, w0 = jax.block_until_ready(out0), jax.block_until_ready(w0)

    # self-attention branch (selfatt=True), single query tile
    out1, w1 = luong_gate_attention_forward(h, context, params, selfatt=True)
    out1, w1 = jax.block_until_ready(out1), jax.block_until_ready(w1)

    # sanity check against pure-JAX reference (exact softmax -> tight tolerance)
    r_out0, r_w0 = _ref_forward(h, context, params, selfatt=False)
    r_out1, r_w1 = _ref_forward(h, context, params, selfatt=True)
    assert out0.shape == (B, H) and w0.shape == (B, S)
    assert out1.shape == (S, B, H) and w1.shape == (B, S, S)
    assert jnp.allclose(out0, r_out0, atol=1e-4, rtol=1e-4)
    assert jnp.allclose(w0, r_w0, atol=1e-4, rtol=1e-4)
    assert jnp.allclose(out1, r_out1, atol=1e-4, rtol=1e-4)
    assert jnp.allclose(w1, r_w1, atol=1e-4, rtol=1e-4)

    # exercise the multi-query-tile path (q-axis loop + per-batch key cache)
    S2 = 16
    ctx2 = jax.random.normal(jax.random.PRNGKey(1), (B, S2, H), jnp.float32)
    out2, w2 = luong_gate_attention_forward(h, ctx2, params, selfatt=True,
                                            tile_q=8)
    out2, w2 = jax.block_until_ready(out2), jax.block_until_ready(w2)
    r_out2, r_w2 = _ref_forward(h, ctx2, params, selfatt=True)
    assert out2.shape == (S2, B, H) and w2.shape == (B, S2, S2)
    assert jnp.allclose(out2, r_out2, atol=1e-4, rtol=1e-4)
    assert jnp.allclose(w2, r_w2, atol=1e-4, rtol=1e-4)

    print("KERNEL_OK")
</pallas_src>

<mosaic_0001>
module attributes {stable_mosaic.version = 11 : i64} {
  func.func @_crossatt_kernel(%arg0: i32, %arg1: memref<2x32xf32, #tpu.memory_space<vmem>>, %arg2: memref<2x8x32xf32, #tpu.memory_space<vmem>>, %arg3: memref<32x32xf32, #tpu.memory_space<vmem>>, %arg4: memref<1x32xf32, #tpu.memory_space<vmem>>, %arg5: memref<32x32xf32, #tpu.memory_space<vmem>>, %arg6: memref<1x32xf32, #tpu.memory_space<vmem>>, %arg7: memref<32x32xf32, #tpu.memory_space<vmem>>, %arg8: memref<32x32xf32, #tpu.memory_space<vmem>>, %arg9: memref<1x32xf32, #tpu.memory_space<vmem>>, %arg10: memref<32x32xf32, #tpu.memory_space<vmem>>, %arg11: memref<1x32xf32, #tpu.memory_space<vmem>>, %arg12: memref<2x32xf32, #tpu.memory_space<vmem>>, %arg13: memref<2x8xf32, #tpu.memory_space<vmem>>) attributes {dimension_semantics = [#tpu.dimension_semantics<parallel>], iteration_bounds = array<i64: 1>, scalar_prefetch = 0 : i64, scratch_operands = 0 : i64, tpu.core_type = #tpu.core_type<tc>, window_params = [{transform_indices = @transform_0, window_bounds = array<i64: 2, 32>}, {transform_indices = @transform_1, window_bounds = array<i64: 2, 8, 32>}, {pipeline_mode = #tpu.pipeline_mode<synchronous>, transform_indices = @transform_2, window_bounds = array<i64: 32, 32>}, {pipeline_mode = #tpu.pipeline_mode<synchronous>, transform_indices = @transform_3, window_bounds = array<i64: 1, 32>}, {pipeline_mode = #tpu.pipeline_mode<synchronous>, transform_indices = @transform_4, window_bounds = array<i64: 32, 32>}, {pipeline_mode = #tpu.pipeline_mode<synchronous>, transform_indices = @transform_5, window_bounds = array<i64: 1, 32>}, {pipeline_mode = #tpu.pipeline_mode<synchronous>, transform_indices = @transform_6, window_bounds = array<i64: 32, 32>}, {pipeline_mode = #tpu.pipeline_mode<synchronous>, transform_indices = @transform_7, window_bounds = array<i64: 32, 32>}, {pipeline_mode = #tpu.pipeline_mode<synchronous>, transform_indices = @transform_8, window_bounds = array<i64: 1, 32>}, {pipeline_mode = #tpu.pipeline_mode<synchronous>, transform_indices = @transform_9, window_bounds = array<i64: 32, 32>}, {pipeline_mode = #tpu.pipeline_mode<synchronous>, transform_indices = @transform_10, window_bounds = array<i64: 1, 32>}, {transform_indices = @transform_11, window_bounds = array<i64: 2, 32>}, {transform_indices = @transform_12, window_bounds = array<i64: 2, 8>}]} {
    %c0 = arith.constant 0 : index
    %c0_0 = arith.constant 0 : index
    %0 = vector.load %arg1[%c0, %c0_0] : memref<2x32xf32, #tpu.memory_space<vmem>>, vector<2x32xf32>
    %c0_1 = arith.constant 0 : index
    %c0_2 = arith.constant 0 : index
    %c0_3 = arith.constant 0 : index
    %1 = vector.load %arg2[%c0_1, %c0_2, %c0_3] : memref<2x8x32xf32, #tpu.memory_space<vmem>>, vector<2x8x32xf32>
    %c0_4 = arith.constant 0 : index
    %c0_5 = arith.constant 0 : index
    %2 = vector.load %arg3[%c0_4, %c0_5] : memref<32x32xf32, #tpu.memory_space<vmem>>, vector<32x32xf32>
    %cst = arith.constant dense<0.000000e+00> : vector<2x32xf32>
    %3 = tpu.matmul %0, %2, %cst {dimension_numbers = #tpu.dot_dimension_numbers<[1], [0], [0], [1], [0, 0, 1, 1], [], []>} : vector<2x32xf32>, vector<32x32xf32>, vector<2x32xf32> -> vector<2x32xf32>
    %c0_6 = arith.constant 0 : index
    %c0_7 = arith.constant 0 : index
    %4 = vector.load %arg4[%c0_6, %c0_7] : memref<1x32xf32, #tpu.memory_space<vmem>>, vector<1x32xf32>
    %5 = vector.broadcast %4 : vector<1x32xf32> to vector<2x32xf32>
    %6 = arith.addf %3, %5 : vector<2x32xf32>
    %cst_8 = arith.constant 0.000000e+00 : f32
    %7 = vector.broadcast %cst_8 : f32 to vector<2x32xf32>
    %8 = arith.cmpf ogt, %6, %7 : vector<2x32xf32>
    %9 = math.exp %6 : vector<2x32xf32>
    %cst_9 = arith.constant 1.000000e+00 : f32
    %10 = vector.broadcast %cst_9 : f32 to vector<2x32xf32>
    %11 = arith.subf %9, %10 : vector<2x32xf32>
    %cst_10 = arith.constant 1.67326319 : f32
    %12 = vector.broadcast %cst_10 : f32 to vector<2x32xf32>
    %13 = arith.mulf %12, %11 : vector<2x32xf32>
    %14 = arith.select %8, %6, %13 : vector<2x32xi1>, vector<2x32xf32>
    %cst_11 = arith.constant 1.05070102 : f32
    %15 = vector.broadcast %cst_11 : f32 to vector<2x32xf32>
    %16 = arith.mulf %15, %14 : vector<2x32xf32>
    %c0_12 = arith.constant 0 : index
    %c0_13 = arith.constant 0 : index
    %17 = vector.load %arg5[%c0_12, %c0_13] : memref<32x32xf32, #tpu.memory_space<vmem>>, vector<32x32xf32>
    %cst_14 = arith.constant dense<0.000000e+00> : vector<2x32xf32>
    %18 = tpu.matmul %16, %17, %cst_14 {dimension_numbers = #tpu.dot_dimension_numbers<[1], [0], [0], [1], [0, 0, 1, 1], [], []>} : vector<2x32xf32>, vector<32x32xf32>, vector<2x32xf32> -> vector<2x32xf32>
    %c0_15 = arith.constant 0 : index
    %c0_16 = arith.constant 0 : index
    %19 = vector.load %arg6[%c0_15, %c0_16] : memref<1x32xf32, #tpu.memory_space<vmem>>, vector<1x32xf32>
    %20 = vector.broadcast %19 : vector<1x32xf32> to vector<2x32xf32>
    %21 = arith.addf %18, %20 : vector<2x32xf32>
    %cst_17 = arith.constant 0.000000e+00 : f32
    %22 = vector.broadcast %cst_17 : f32 to vector<2x32xf32>
    %23 = arith.cmpf ogt, %21, %22 : vector<2x32xf32>
    %24 = math.exp %21 : vector<2x32xf32>
    %cst_18 = arith.constant 1.000000e+00 : f32
    %25 = vector.broadcast %cst_18 : f32 to vector<2x32xf32>
    %26 = arith.subf %24, %25 : vector<2x32xf32>
    %cst_19 = arith.constant 1.67326319 : f32
    %27 = vector.broadcast %cst_19 : f32 to vector<2x32xf32>
    %28 = arith.mulf %27, %26 : vector<2x32xf32>
    %29 = arith.select %23, %21, %28 : vector<2x32xi1>, vector<2x32xf32>
    %cst_20 = arith.constant 1.05070102 : f32
    %30 = vector.broadcast %cst_20 : f32 to vector<2x32xf32>
    %31 = arith.mulf %30, %29 : vector<2x32xf32>
    %32 = vector.shape_cast %31 : vector<2x32xf32> to vector<2x1x32xf32>
    "tpu.trace_start"() <{level = 10 : i32, message = "bqh,bsh->bqs"}> : () -> ()
    %cst_21 = arith.constant dense<0.000000e+00> : vector<2x1x8xf32>
    %33 = tpu.matmul %32, %1, %cst_21 {dimension_numbers = #tpu.dot_dimension_numbers<[2], [2], [1], [1], [0, 0, 0, 1, 1, 1], [0], [0]>} : vector<2x1x32xf32>, vector<2x8x32xf32>, vector<2x1x8xf32> -> vector<2x1x8xf32>
    "tpu.trace_stop"() : () -> ()
    %cst_22 = arith.constant dense<0xFF800000> : vector<2x1xf32>
    %34 = vector.multi_reduction <maximumf>, %33, %cst_22 [2] : vector<2x1x8xf32> to vector<2x1xf32>
    %35 = vector.shape_cast %34 : vector<2x1xf32> to vector<2x1x1xf32>
    %36 = vector.broadcast %35 : vector<2x1x1xf32> to vector<2x1x8xf32>
    %37 = arith.subf %33, %36 : vector<2x1x8xf32>
    %38 = math.exp %37 : vector<2x1x8xf32>
    %cst_23 = arith.constant dense<0.000000e+00> : vector<2x1xf32>
    %39 = vector.multi_reduction <add>, %38, %cst_23 [2] : vector<2x1x8xf32> to vector<2x1xf32>
    %40 = vector.shape_cast %39 : vector<2x1xf32> to vector<2x1x1xf32>
    %cst_24 = arith.constant 1.000000e+00 : f32
    %41 = vector.broadcast %cst_24 : f32 to vector<2x1x1xf32>
    %42 = arith.divf %41, %40 : vector<2x1x1xf32>
    %43 = vector.broadcast %42 : vector<2x1x1xf32> to vector<2x1x8xf32>
    %44 = arith.mulf %38, %43 : vector<2x1x8xf32>
    "tpu.trace_start"() <{level = 10 : i32, message = "bqs,bsh->bqh"}> : () -> ()
    %cst_25 = arith.constant dense<0.000000e+00> : vector<2x1x32xf32>
    %45 = tpu.matmul %44, %1, %cst_25 {dimension_numbers = #tpu.dot_dimension_numbers<[2], [1], [1], [2], [0, 0, 0, 1, 1, 2], [0], [0]>} : vector<2x1x8xf32>, vector<2x8x32xf32>, vector<2x1x32xf32> -> vector<2x1x32xf32>
    "tpu.trace_stop"() : () -> ()
    %46 = vector.shape_cast %45 : vector<2x1x32xf32> to vector<2x32xf32>
    %c0_26 = arith.constant 0 : index
    %c0_27 = arith.constant 0 : index
    %47 = vector.load %arg7[%c0_26, %c0_27] : memref<32x32xf32, #tpu.memory_space<vmem>>, vector<32x32xf32>
    %cst_28 = arith.constant dense<0.000000e+00> : vector<2x32xf32>
    %48 = tpu.matmul %0, %47, %cst_28 {dimension_numbers = #tpu.dot_dimension_numbers<[1], [0], [0], [1], [0, 0, 1, 1], [], []>} : vector<2x32xf32>, vector<32x32xf32>, vector<2x32xf32> -> vector<2x32xf32>
    %c0_29 = arith.constant 0 : index
    %c0_30 = arith.constant 0 : index
    %49 = vector.load %arg8[%c0_29, %c0_30] : memref<32x32xf32, #tpu.memory_space<vmem>>, vector<32x32xf32>
    %cst_31 = arith.constant dense<0.000000e+00> : vector<2x32xf32>
    %50 = tpu.matmul %46, %49, %cst_31 {dimension_numbers = #tpu.dot_dimension_numbers<[1], [0], [0], [1], [0, 0, 1, 1], [], []>} : vector<2x32xf32>, vector<32x32xf32>, vector<2x32xf32> -> vector<2x32xf32>
    %51 = arith.addf %48, %50 : vector<2x32xf32>
    %c0_32 = arith.constant 0 : index
    %c0_33 = arith.constant 0 : index
    %52 = vector.load %arg9[%c0_32, %c0_33] : memref<1x32xf32, #tpu.memory_space<vmem>>, vector<1x32xf32>
    %53 = vector.broadcast %52 : vector<1x32xf32> to vector<2x32xf32>
    %54 = arith.addf %51, %53 : vector<2x32xf32>
    %cst_34 = arith.constant 0.000000e+00 : f32
    %55 = vector.broadcast %cst_34 : f32 to vector<2x32xf32>
    %56 = arith.cmpf ogt, %54, %55 : vector<2x32xf32>
    %57 = math.exp %54 : vector<2x32xf32>
    %cst_35 = arith.constant 1.000000e+00 : f32
    %58 = vector.broadcast %cst_35 : f32 to vector<2x32xf32>
    %59 = arith.subf %57, %58 : vector<2x32xf32>
    %cst_36 = arith.constant 1.67326319 : f32
    %60 = vector.broadcast %cst_36 : f32 to vector<2x32xf32>
    %61 = arith.mulf %60, %59 : vector<2x32xf32>
    %62 = arith.select %56, %54, %61 : vector<2x32xi1>, vector<2x32xf32>
    %cst_37 = arith.constant 1.05070102 : f32
    %63 = vector.broadcast %cst_37 : f32 to vector<2x32xf32>
    %64 = arith.mulf %63, %62 : vector<2x32xf32>
    %c0_38 = arith.constant 0 : index
    %c0_39 = arith.constant 0 : index
    %65 = vector.load %arg10[%c0_38, %c0_39] : memref<32x32xf32, #tpu.memory_space<vmem>>, vector<32x32xf32>
    %cst_40 = arith.constant dense<0.000000e+00> : vector<2x32xf32>
    %66 = tpu.matmul %64, %65, %cst_40 {dimension_numbers = #tpu.dot_dimension_numbers<[1], [0], [0], [1], [0, 0, 1, 1], [], []>} : vector<2x32xf32>, vector<32x32xf32>, vector<2x32xf32> -> vector<2x32xf32>
    %c0_41 = arith.constant 0 : index
    %c0_42 = arith.constant 0 : index
    %67 = vector.load %arg11[%c0_41, %c0_42] : memref<1x32xf32, #tpu.memory_space<vmem>>, vector<1x32xf32>
    %68 = vector.broadcast %67 : vector<1x32xf32> to vector<2x32xf32>
    %69 = arith.addf %66, %68 : vector<2x32xf32>
    %cst_43 = arith.constant 0.000000e+00 : f32
    %70 = vector.broadcast %cst_43 : f32 to vector<2x32xf32>
    %71 = arith.cmpf ogt, %69, %70 : vector<2x32xf32>
    %72 = math.exp %69 : vector<2x32xf32>
    %cst_44 = arith.constant 1.000000e+00 : f32
    %73 = vector.broadcast %cst_44 : f32 to vector<2x32xf32>
    %74 = arith.subf %72, %73 : vector<2x32xf32>
    %cst_45 = arith.constant 1.67326319 : f32
    %75 = vector.broadcast %cst_45 : f32 to vector<2x32xf32>
    %76 = arith.mulf %75, %74 : vector<2x32xf32>
    %77 = arith.select %71, %69, %76 : vector<2x32xi1>, vector<2x32xf32>
    %cst_46 = arith.constant 1.05070102 : f32
    %78 = vector.broadcast %cst_46 : f32 to vector<2x32xf32>
    %79 = arith.mulf %78, %77 : vector<2x32xf32>
    %c0_47 = arith.constant 0 : index
    %c0_48 = arith.constant 0 : index
    %80 = vector.load %arg12[%c0_47, %c0_48] : memref<2x32xf32, #tpu.memory_space<vmem>>, vector<2x32xf32>
    tpu.vector_store %arg12[%c0_47, %c0_48], %79 {strides = array<i32>} : memref<2x32xf32, #tpu.memory_space<vmem>>, vector<2x32xf32>,
    %81 = vector.shape_cast %44 : vector<2x1x8xf32> to vector<2x8xf32>
    %c0_49 = arith.constant 0 : index
    %c0_50 = arith.constant 0 : index
    %82 = vector.load %arg13[%c0_49, %c0_50] : memref<2x8xf32, #tpu.memory_space<vmem>>, vector<2x8xf32>
    tpu.vector_store %arg13[%c0_49, %c0_50], %81 {strides = array<i32>} : memref<2x8xf32, #tpu.memory_space<vmem>>, vector<2x8xf32>,
    return
  }
  func.func @transform_0(%arg0: i32) -> (i32, i32) {
    %c0_i32 = arith.constant 0 : i32
    %c0_i32_0 = arith.constant 0 : i32
    return %arg0, %c0_i32 : i32, i32
  }
  func.func @transform_1(%arg0: i32) -> (i32, i32, i32) {
    %c0_i32 = arith.constant 0 : i32
    %c0_i32_0 = arith.constant 0 : i32
    %c0_i32_1 = arith.constant 0 : i32
    return %arg0, %c0_i32, %c0_i32_0 : i32, i32, i32
  }
  func.func @transform_2(%arg0: i32) -> (i32, i32) {
    %c0_i32 = arith.constant 0 : i32
    %c0_i32_0 = arith.constant 0 : i32
    %c0_i32_1 = arith.constant 0 : i32
    return %c0_i32, %c0_i32_0 : i32, i32
  }
  func.func @transform_3(%arg0: i32) -> (i32, i32) {
    %c0_i32 = arith.constant 0 : i32
    %c0_i32_0 = arith.constant 0 : i32
    %c0_i32_1 = arith.constant 0 : i32
    return %c0_i32, %c0_i32_0 : i32, i32
  }
  func.func @transform_4(%arg0: i32) -> (i32, i32) {
    %c0_i32 = arith.constant 0 : i32
    %c0_i32_0 = arith.constant 0 : i32
    %c0_i32_1 = arith.constant 0 : i32
    return %c0_i32, %c0_i32_0 : i32, i32
  }
  func.func @transform_5(%arg0: i32) -> (i32, i32) {
    %c0_i32 = arith.constant 0 : i32
    %c0_i32_0 = arith.constant 0 : i32
    %c0_i32_1 = arith.constant 0 : i32
    return %c0_i32, %c0_i32_0 : i32, i32
  }
  func.func @transform_6(%arg0: i32) -> (i32, i32) {
    %c0_i32 = arith.constant 0 : i32
    %c0_i32_0 = arith.constant 0 : i32
    %c0_i32_1 = arith.constant 0 : i32
    return %c0_i32, %c0_i32_0 : i32, i32
  }
  func.func @transform_7(%arg0: i32) -> (i32, i32) {
    %c0_i32 = arith.constant 0 : i32
    %c0_i32_0 = arith.constant 0 : i32
    %c0_i32_1 = arith.constant 0 : i32
    return %c0_i32, %c0_i32_0 : i32, i32
  }
  func.func @transform_8(%arg0: i32) -> (i32, i32) {
    %c0_i32 = arith.constant 0 : i32
    %c0_i32_0 = arith.constant 0 : i32
    %c0_i32_1 = arith.constant 0 : i32
    return %c0_i32, %c0_i32_0 : i32, i32
  }
  func.func @transform_9(%arg0: i32) -> (i32, i32) {
    %c0_i32 = arith.constant 0 : i32
    %c0_i32_0 = arith.constant 0 : i32
    %c0_i32_1 = arith.constant 0 : i32
    return %c0_i32, %c0_i32_0 : i32, i32
  }
  func.func @transform_10(%arg0: i32) -> (i32, i32) {
    %c0_i32 = arith.constant 0 : i32
    %c0_i32_0 = arith.constant 0 : i32
    %c0_i32_1 = arith.constant 0 : i32
    return %c0_i32, %c0_i32_0 : i32, i32
  }
  func.func @transform_11(%arg0: i32) -> (i32, i32) {
    %c0_i32 = arith.constant 0 : i32
    %c0_i32_0 = arith.constant 0 : i32
    return %arg0, %c0_i32 : i32, i32
  }
  func.func @transform_12(%arg0: i32) -> (i32, i32) {
    %c0_i32 = arith.constant 0 : i32
    %c0_i32_0 = arith.constant 0 : i32
    return %arg0, %c0_i32 : i32, i32
  }
}

</mosaic_0001>

<llo_original>
// kernel: luong_gate_attention_forward.1
$region0: #{luong_gate_attention_forward.1}
  #allocation0 [shape = 'u32[]', space=smem, size = 0x4, offset = 0x4, fixed_abs, tag = 'smem constant byte address 0x4 - core index']
  #allocation1 [shape = 'u32[144,128]{1,0:T(1,128)}', space=vmem, size = 0x12000, scoped, tag = 'internal scratch']
  %s0 = inlined_call_operand.vmem [shape: f32[2,32], index: 0, kind: input, shape index: {}]
  %s1 = inlined_call_operand.vmem [shape: f32[2,8,32], index: 1, kind: input, shape index: {}]
  %s2 = inlined_call_operand.vmem [shape: f32[32,32], index: 2, kind: input, shape index: {}]
  %s3 = inlined_call_operand.vmem [shape: f32[1,32], index: 3, kind: input, shape index: {}]
  %s4 = inlined_call_operand.vmem [shape: f32[32,32], index: 4, kind: input, shape index: {}]
  %s5 = inlined_call_operand.vmem [shape: f32[1,32], index: 5, kind: input, shape index: {}]
  %s6 = inlined_call_operand.vmem [shape: f32[32,32], index: 6, kind: input, shape index: {}]
  %s7 = inlined_call_operand.vmem [shape: f32[32,32], index: 7, kind: input, shape index: {}]
  %s8 = inlined_call_operand.vmem [shape: f32[1,32], index: 8, kind: input, shape index: {}]
  %s9 = inlined_call_operand.vmem [shape: f32[32,32], index: 9, kind: input, shape index: {}]
  %s10 = inlined_call_operand.vmem [shape: f32[1,32], index: 10, kind: input, shape index: {}]
  %s11 = inlined_call_operand.hbm [shape: f32[2,32], index: 11, kind: output, shape index: {0}]
  %s12 = inlined_call_operand.hbm [shape: f32[2,8], index: 12, kind: output, shape index: {1}]
  %13 = xla_tuple %s11, %s12
  %s14 = sld [smem:[#allocation0]]
  $region62: #{luong_gate_attention_forward.1} parent=0
    _
  %s16 = ssub.s32 1, %s14
  %s17 = scalar_select 0, %s16, %s14
  $region1: #{luong_gate_attention_forward.1} parent=0
    #allocation2 [shape = 'u8[1024]{0}', space=vmem, size = 0x400, scoped, tag = 'output window, operand 0, single buffered']
    #allocation3 [shape = 's32[1]{0}', space=sflag, size = 0x4, scoped, tag = 'scoped memory for luong_gate_attention_forward.1']
    #allocation4 [shape = 'u8[1024]{0}', space=vmem, size = 0x400, scoped, tag = 'output window, operand 1, single buffered']
    #allocation5 [shape = 's32[1]{0}', space=sflag, size = 0x4, scoped, tag = 'scoped memory for luong_gate_attention_forward.1']
    %18 = vsyncpa [#allocation3], 0
    %19 = vsyncpa [#allocation5], 0
    // Predicated region
    $region2: #{luong_gate_attention_forward.1} parent=1 // pred_check
      _
    $region3: #{luong_gate_attention_forward.1} parent=1 // pred_check_branch
      %21 = sbr.rel (0) target = $region5
    $region4: #{luong_gate_attention_forward.1} parent=1 // pred_region
      _
    $region5: #{luong_gate_attention_forward.1} parent=1 // pred_fallthru
      _
    // Predicated region
    $region6: #{luong_gate_attention_forward.1} parent=1 // pred_check
      _
    $region7: #{luong_gate_attention_forward.1} parent=1 // pred_check_branch
      %23 = sbr.rel (0) target = $region9
    $region8: #{luong_gate_attention_forward.1} parent=1 // pred_region
      _
    $region9: #{luong_gate_attention_forward.1} parent=1 // pred_fallthru
      _
    // Predicated region
    $region10: #{luong_gate_attention_forward.1} parent=1 // pred_check
      _
    $region11: #{luong_gate_attention_forward.1} parent=1 // pred_check_branch
      %25 = sbr.rel (0) target = $region13
    $region12: #{luong_gate_attention_forward.1} parent=1 // pred_region
      _
    $region13: #{luong_gate_attention_forward.1} parent=1 // pred_fallthru
      _
    // Predicated region
    $region14: #{luong_gate_attention_forward.1} parent=1 // pred_check
      _
    $region15: #{luong_gate_attention_forward.1} parent=1 // pred_check_branch
      %27 = sbr.rel (0) target = $region17
    $region16: #{luong_gate_attention_forward.1} parent=1 // pred_region
      _
    $region17: #{luong_gate_attention_forward.1} parent=1 // pred_fallthru
      _
    // Predicated region
    $region18: #{luong_gate_attention_forward.1} parent=1 // pred_check
      _
    $region19: #{luong_gate_attention_forward.1} parent=1 // pred_check_branch
      %29 = sbr.rel (0) target = $region21
    $region20: #{luong_gate_attention_forward.1} parent=1 // pred_region
      _
    $region21: #{luong_gate_attention_forward.1} parent=1 // pred_fallthru
      _
    // Predicated region
    $region22: #{luong_gate_attention_forward.1} parent=1 // pred_check
      _
    $region23: #{luong_gate_attention_forward.1} parent=1 // pred_check_branch
      %31 = sbr.rel (0) target = $region25
    $region24: #{luong_gate_attention_forward.1} parent=1 // pred_region
      _
    $region25: #{luong_gate_attention_forward.1} parent=1 // pred_fallthru
      _
    // Predicated region
    $region26: #{luong_gate_attention_forward.1} parent=1 // pred_check
      _
    $region27: #{luong_gate_attention_forward.1} parent=1 // pred_check_branch
      %33 = sbr.rel (0) target = $region29
    $region28: #{luong_gate_attention_forward.1} parent=1 // pred_region
      _
    $region29: #{luong_gate_attention_forward.1} parent=1 // pred_fallthru
      _
    // Predicated region
    $region30: #{luong_gate_attention_forward.1} parent=1 // pred_check
      _
    $region31: #{luong_gate_attention_forward.1} parent=1 // pred_check_branch
      %35 = sbr.rel (0) target = $region33
    $region32: #{luong_gate_attention_forward.1} parent=1 // pred_region
      _
    $region33: #{luong_gate_attention_forward.1} parent=1 // pred_fallthru
      _
    // Predicated region
    $region34: #{luong_gate_attention_forward.1} parent=1 // pred_check
      _
    $region35: #{luong_gate_attention_forward.1} parent=1 // pred_check_branch
      %37 = sbr.rel (0) target = $region37
    $region36: #{luong_gate_attention_forward.1} parent=1 // pred_region
      _
    $region37: #{luong_gate_attention_forward.1} parent=1 // pred_fallthru
      _
    // Predicated region
    $region38: #{luong_gate_attention_forward.1} parent=1 // pred_check
      _
    $region39: #{luong_gate_attention_forward.1} parent=1 // pred_check_branch
      %39 = sbr.rel (0) target = $region41
    $region40: #{luong_gate_attention_forward.1} parent=1 // pred_region
      _
    $region41: #{luong_gate_attention_forward.1} parent=1 // pred_fallthru
      _
    // Predicated region
    $region42: #{luong_gate_attention_forward.1} parent=1 // pred_check
      _
    $region43: #{luong_gate_attention_forward.1} parent=1 // pred_check_branch
      %41 = sbr.rel (0) target = $region45
    $region44: #{luong_gate_attention_forward.1} parent=1 // pred_region
      _
    $region45: #{luong_gate_attention_forward.1} parent=1 // pred_fallthru
      _
    %v42 = vld [vmem:[%s0] sm:$0x3]
    %v43 = vld [vmem:[%s1] sm:$0xff]
    %v44 = vld [vmem:[%s1 + $0x8] sm:$0xff]
    %v45 = vld [vmem:[%s2] sm:$0xff]
    %v46 = vld [vmem:[%s2 + $0x8] sm:$0xff]
    %v47 = vld [vmem:[%s2 + $0x10] sm:$0xff]
    %v48 = vld [vmem:[%s2 + $0x18] sm:$0xff]
    %v49 = vld [vmem:[%s3] sm:$0x1]
    %v51 = vlaneseq
    %v52 = vshrl.u32 %v51, 7
    %v53 = vsub.s32 0, %v52
    %v54 = vrot.slane %v49, %v53
    %vm56 = vcmask 261120
    %v58 = vsel %vm56, %v42, 0
    %60 = vmatprep.subr.mxu0 0.0
    %61 = vmatpush1.msra.mxu0 %v45
    %62 = vmatprep.subr.mxu0 0.0
    %63 = vmatpush1.msra.mxu0 %v46
    %64 = vmatprep.subr.mxu0 0.0
    %65 = vmatpush1.msra.mxu0 %v47
    %66 = vmatprep.subr.mxu0 0.0
    %67 = vmatpush1.msra.mxu0 %v48
    %68 = vmatprep.subr.mxu0 0.0
    %69 = vmatpush1.msra.mxu0 0.0
    %70 = vmatprep.subr.mxu0 0.0
    %71 = vmatpush1.msra.mxu0 0.0
    %72 = vmatprep.subr.mxu0 0.0
    %73 = vmatpush1.msra.mxu0 0.0
    %74 = vmatprep.subr.mxu0 0.0
    %75 = vmatpush1.msra.mxu0 0.0
    %76 = vmatprep.subr.mxu0 0.0
    %77 = vmatpush1.msra.mxu0 0.0
    %78 = vmatprep.subr.mxu0 0.0
    %79 = vmatpush1.msra.mxu0 0.0
    %80 = vmatprep.subr.mxu0 0.0
    %81 = vmatpush1.msra.mxu0 0.0
    %82 = vmatprep.subr.mxu0 0.0
    %83 = vmatpush1.msra.mxu0 0.0
    %84 = vmatprep.subr.mxu0 0.0
    %85 = vmatpush1.msra.mxu0 0.0
    %86 = vmatprep.subr.mxu0 0.0
    %87 = vmatpush1.msra.mxu0 0.0
    %88 = vmatprep.subr.mxu0 0.0
    %89 = vmatpush1.msra.mxu0 0.0
    %90 = vmatprep.subr.mxu0 0.0
    %91 = vmatpush1.msra.mxu0 0.0
    %92 = vmatprep.subr.mxu0 0.0
    %93 = vmatpush1.msra.mxu0 0.0
    %94 = vmatprep.subr.mxu0 0.0
    %95 = vmatpush1.msra.mxu0 0.0
    %96 = vmatprep.subr.mxu0 0.0
    %97 = vmatpush1.msra.mxu0 0.0
    %98 = vmatprep.subr.mxu0 0.0
    %99 = vmatpush1.msra.mxu0 0.0
    %100 = vmatprep.subr.mxu0 0.0
    %101 = vmatpush1.msra.mxu0 0.0
    %102 = vmatprep.subr.mxu0 0.0
    %103 = vmatpush1.msra.mxu0 0.0
    %104 = vmatprep.subr.mxu0 0.0
    %105 = vmatpush1.msra.mxu0 0.0
    %106 = vmatprep.subr.mxu0 0.0
    %107 = vmatpush1.msra.mxu0 0.0
    %108 = vmatprep.subr.mxu0 0.0
    %109 = vmatpush1.msra.mxu0 0.0
    %110 = vmatprep.subr.mxu0 0.0
    %111 = vmatpush1.msra.mxu0 0.0
    %112 = vmatprep.subr.mxu0 0.0
    %113 = vmatpush1.msra.mxu0 0.0
    %114 = vmatprep.subr.mxu0 0.0
    %115 = vmatpush1.msra.mxu0 0.0
    %116 = vmatprep.subr.mxu0 0.0
    %117 = vmatpush1.msra.mxu0 0.0
    %118 = vmatprep.subr.mxu0 0.0
    %119 = vmatpush1.msra.mxu0 0.0
    %120 = vmatprep.subr.mxu0 0.0
    %121 = vmatpush1.msra.mxu0 0.0
    %122 = vmatprep.subr.mxu0 0.0
    %123 = vmatpush1.msra.mxu0 0.0
    %124 = vmatprep.mubr.f32.mxu0 0.0
    %125 = vmatmul.mubr.f32.gmra.mrb[0].mxu0 %v58
    %v126 = vpop.f32.mrb[0].mxu0
    %v127 = vadd.f32 %v54, %v126
    %v128 = vpop.f32.mrb[0].mxu0
    %129 = vdwg.mxu0
    %vm130 = vcmp.gt.f32.partialorder %v127, 0.0
    %v131 = vmul.f32 %v127, 1.442695
    %v132 = vpow.pop %v131
    %v133 = vsub.f32 %v132, 1.0
    %v134 = vmul.f32 %v133, 1.6732632
    %v135 = vsel %vm130, %v127, %v134
    %v136 = vmul.f32 %v135, 1.050701
    %v137 = vld [vmem:[%s4] sm:$0xff]
    %v138 = vld [vmem:[%s4 + $0x8] sm:$0xff]
    %v139 = vld [vmem:[%s4 + $0x10] sm:$0xff]
    %v140 = vld [vmem:[%s4 + $0x18] sm:$0xff]
    %v141 = vld [vmem:[%s5] sm:$0x1]
    %v143 = vlaneseq
    %v144 = vshrl.u32 %v143, 7
    %v145 = vsub.s32 0, %v144
    %v146 = vrot.slane %v141, %v145
    %v149 = vsel %vm56, %v136, 0
    %151 = vmatprep.subr.mxu0 0.0
    %152 = vmatpush1.msra.mxu0 %v137
    %153 = vmatprep.subr.mxu0 0.0
    %154 = vmatpush1.msra.mxu0 %v138
    %155 = vmatprep.subr.mxu0 0.0
    %156 = vmatpush1.msra.mxu0 %v139
    %157 = vmatprep.subr.mxu0 0.0
    %158 = vmatpush1.msra.mxu0 %v140
    %159 = vmatprep.subr.mxu0 0.0
    %160 = vmatpush1.msra.mxu0 0.0
    %161 = vmatprep.subr.mxu0 0.0
    %162 = vmatpush1.msra.mxu0 0.0
    %163 = vmatprep.subr.mxu0 0.0
    %164 = vmatpush1.msra.mxu0 0.0
    %165 = vmatprep.subr.mxu0 0.0
    %166 = vmatpush1.msra.mxu0 0.0
    %167 = vmatprep.subr.mxu0 0.0
    %168 = vmatpush1.msra.mxu0 0.0
    %169 = vmatprep.subr.mxu0 0.0
    %170 = vmatpush1.msra.mxu0 0.0
    %171 = vmatprep.subr.mxu0 0.0
    %172 = vmatpush1.msra.mxu0 0.0
    %173 = vmatprep.subr.mxu0 0.0
    %174 = vmatpush1.msra.mxu0 0.0
    %175 = vmatprep.subr.mxu0 0.0
    %176 = vmatpush1.msra.mxu0 0.0
    %177 = vmatprep.subr.mxu0 0.0
    %178 = vmatpush1.msra.mxu0 0.0
    %179 = vmatprep.subr.mxu0 0.0
    %180 = vmatpush1.msra.mxu0 0.0
    %181 = vmatprep.subr.mxu0 0.0
    %182 = vmatpush1.msra.mxu0 0.0
    %183 = vmatprep.subr.mxu0 0.0
    %184 = vmatpush1.msra.mxu0 0.0
    %185 = vmatprep.subr.mxu0 0.0
    %186 = vmatpush1.msra.mxu0 0.0
    %187 = vmatprep.subr.mxu0 0.0
    %188 = vmatpush1.msra.mxu0 0.0
    %189 = vmatprep.subr.mxu0 0.0
    %190 = vmatpush1.msra.mxu0 0.0
    %191 = vmatprep.subr.mxu0 0.0
    %192 = vmatpush1.msra.mxu0 0.0
    %193 = vmatprep.subr.mxu0 0.0
    %194 = vmatpush1.msra.mxu0 0.0
    %195 = vmatprep.subr.mxu0 0.0
    %196 = vmatpush1.msra.mxu0 0.0
    %197 = vmatprep.subr.mxu0 0.0
    %198 = vmatpush1.msra.mxu0 0.0
    %199 = vmatprep.subr.mxu0 0.0
    %200 = vmatpush1.msra.mxu0 0.0
    %201 = vmatprep.subr.mxu0 0.0
    %202 = vmatpush1.msra.mxu0 0.0
    %203 = vmatprep.subr.mxu0 0.0
    %204 = vmatpush1.msra.mxu0 0.0
    %205 = vmatprep.subr.mxu0 0.0
    %206 = vmatpush1.msra.mxu0 0.0
    %207 = vmatprep.subr.mxu0 0.0
    %208 = vmatpush1.msra.mxu0 0.0
    %209 = vmatprep.subr.mxu0 0.0
    %210 = vmatpush1.msra.mxu0 0.0
    %211 = vmatprep.subr.mxu0 0.0
    %212 = vmatpush1.msra.mxu0 0.0
    %213 = vmatprep.subr.mxu0 0.0
    %214 = vmatpush1.msra.mxu0 0.0
    %215 = vmatprep.mubr.f32.mxu0 0.0
    %216 = vmatmul.mubr.f32.gmra.mrb[0].mxu0 %v149
    %v217 = vpop.f32.mrb[0].mxu0
    %v218 = vadd.f32 %v146, %v217
    %v219 = vpop.f32.mrb[0].mxu0
    %220 = vdwg.mxu0
    %vm221 = vcmp.gt.f32.partialorder %v218, 0.0
    %v222 = vmul.f32 %v218, 1.442695
    %v223 = vpow.pop %v222
    %v224 = vsub.f32 %v223, 1.0
    %v225 = vmul.f32 %v224, 1.6732632
    %v226 = vsel %vm221, %v218, %v225
    %v227 = vmul.f32 %v226, 1.050701
    %v230 = vunpack.c.l.s4 1966171168
    %v231 = vunpack.c.0.s8 %v230
    %v232 = vlaneseq
    %v233 = vshrl.u32 %v232, 7
    %v234 = vsub.s32 %v231, %v233
    %v235 = vrot.slane %v227, %v234
    %v236 = vcombine.high %v235, %v235
    %v238 = vunpack.c.l.s4 1966171168
    %v239 = vunpack.c.0.s8 %v238
    %v240 = vlaneseq
    %v241 = vshrl.u32 %v240, 7
    %v242 = vsub.s32 %v239, %v241
    %v243 = vrot.slane %v235, %v242
    %v245 = vunpack.c.l.s4 1966171168
    %v246 = vunpack.c.0.s8 %v245
    %v247 = vlaneseq
    %v248 = vshrl.u32 %v247, 7
    %v249 = vsub.s32 %v246, %v248
    %v250 = vrot.slane %v236, %v249
    %v251 = vsel %vm56, %v243, 0
    %v254 = vsel %vm56, %v43, 0
    %256 = vmatprep.subr.mxu0 0.0
    %257 = vmatpush1.xpose.msra.mxu0 %v254
    %258 = vmatprep.subr.mxu0 0.0
    %259 = vmatpush1.xpose.msra.mxu0 0.0
    %260 = vmatprep.subr.mxu0 0.0
    %261 = vmatpush1.xpose.msra.mxu0 0.0
    %262 = vmatprep.subr.mxu0 0.0
    %263 = vmatpush1.xpose.msra.mxu0 0.0
    %264 = vmatprep.subr.mxu0 0.0
    %265 = vmatpush1.xpose.msra.mxu0 0.0
    %266 = vmatprep.subr.mxu0 0.0
    %267 = vmatpush1.xpose.msra.mxu0 0.0
    %268 = vmatprep.subr.mxu0 0.0
    %269 = vmatpush1.xpose.msra.mxu0 0.0
    %270 = vmatprep.subr.mxu0 0.0
    %271 = vmatpush1.xpose.msra.mxu0 0.0
    %272 = vmatprep.subr.mxu0 0.0
    %273 = vmatpush1.xpose.msra.mxu0 0.0
    %274 = vmatprep.subr.mxu0 0.0
    %275 = vmatpush1.xpose.msra.mxu0 0.0
    %276 = vmatprep.subr.mxu0 0.0
    %277 = vmatpush1.xpose.msra.mxu0 0.0
    %278 = vmatprep.subr.mxu0 0.0
    %279 = vmatpush1.xpose.msra.mxu0 0.0
    %280 = vmatprep.subr.mxu0 0.0
    %281 = vmatpush1.xpose.msra.mxu0 0.0
    %282 = vmatprep.subr.mxu0 0.0
    %283 = vmatpush1.xpose.msra.mxu0 0.0
    %284 = vmatprep.subr.mxu0 0.0
    %285 = vmatpush1.xpose.msra.mxu0 0.0
    %286 = vmatprep.subr.mxu0 0.0
    %287 = vmatpush1.xpose.msra.mxu0 0.0
    %288 = vmatprep.subr.mxu0 0.0
    %289 = vmatpush1.xpose.msra.mxu0 0.0
    %290 = vmatprep.subr.mxu0 0.0
    %291 = vmatpush1.xpose.msra.mxu0 0.0
    %292 = vmatprep.subr.mxu0 0.0
    %293 = vmatpush1.xpose.msra.mxu0 0.0
    %294 = vmatprep.subr.mxu0 0.0
    %295 = vmatpush1.xpose.msra.mxu0 0.0
    %296 = vmatprep.subr.mxu0 0.0
    %297 = vmatpush1.xpose.msra.mxu0 0.0
    %298 = vmatprep.subr.mxu0 0.0
    %299 = vmatpush1.xpose.msra.mxu0 0.0
    %300 = vmatprep.subr.mxu0 0.0
    %301 = vmatpush1.xpose.msra.mxu0 0.0
    %302 = vmatprep.subr.mxu0 0.0
    %303 = vmatpush1.xpose.msra.mxu0 0.0
    %304 = vmatprep.subr.mxu0 0.0
    %305 = vmatpush1.xpose.msra.mxu0 0.0
    %306 = vmatprep.subr.mxu0 0.0
    %307 = vmatpush1.xpose.msra.mxu0 0.0
    %308 = vmatprep.subr.mxu0 0.0
    %309 = vmatpush1.xpose.msra.mxu0 0.0
    %310 = vmatprep.subr.mxu0 0.0
    %311 = vmatpush1.xpose.msra.mxu0 0.0
    %312 = vmatprep.subr.mxu0 0.0
    %313 = vmatpush1.xpose.msra.mxu0 0.0
    %314 = vmatprep.subr.mxu0 0.0
    %315 = vmatpush1.xpose.msra.mxu0 0.0
    %316 = vmatprep.subr.mxu0 0.0
    %317 = vmatpush1.xpose.msra.mxu0 0.0
    %318 = vmatprep.subr.mxu0 0.0
    %319 = vmatpush1.xpose.msra.mxu0 0.0
    %320 = vmatprep.mubr.f32.mxu0 0.0
    %321 = vmatmul.mubr.f32.gmra.mrb[0].mxu0 %v251
    %v322 = vpop.f32.mrb[0].mxu0
    %v323 = vadd.f32 0.0, %v322
    %v324 = vpop.f32.mrb[0].mxu0
    %325 = vdwg.mxu0
    %v326 = vsel %vm56, %v250, 0
    %v329 = vsel %vm56, %v44, 0
    %331 = vmatprep.subr.mxu0 0.0
    %332 = vmatpush1.xpose.msra.mxu0 %v329
    %333 = vmatprep.subr.mxu0 0.0
    %334 = vmatpush1.xpose.msra.mxu0 0.0
    %335 = vmatprep.subr.mxu0 0.0
    %336 = vmatpush1.xpose.msra.mxu0 0.0
    %337 = vmatprep.subr.mxu0 0.0
    %338 = vmatpush1.xpose.msra.mxu0 0.0
    %339 = vmatprep.subr.mxu0 0.0
    %340 = vmatpush1.xpose.msra.mxu0 0.0
    %341 = vmatprep.subr.mxu0 0.0
    %342 = vmatpush1.xpose.msra.mxu0 0.0
    %343 = vmatprep.subr.mxu0 0.0
    %344 = vmatpush1.xpose.msra.mxu0 0.0
    %345 = vmatprep.subr.mxu0 0.0
    %346 = vmatpush1.xpose.msra.mxu0 0.0
    %347 = vmatprep.subr.mxu0 0.0
    %348 = vmatpush1.xpose.msra.mxu0 0.0
    %349 = vmatprep.subr.mxu0 0.0
    %350 = vmatpush1.xpose.msra.mxu0 0.0
    %351 = vmatprep.subr.mxu0 0.0
    %352 = vmatpush1.xpose.msra.mxu0 0.0
    %353 = vmatprep.subr.mxu0 0.0
    %354 = vmatpush1.xpose.msra.mxu0 0.0
    %355 = vmatprep.subr.mxu0 0.0
    %356 = vmatpush1.xpose.msra.mxu0 0.0
    %357 = vmatprep.subr.mxu0 0.0
    %358 = vmatpush1.xpose.msra.mxu0 0.0
    %359 = vmatprep.subr.mxu0 0.0
    %360 = vmatpush1.xpose.msra.mxu0 0.0
    %361 = vmatprep.subr.mxu0 0.0
    %362 = vmatpush1.xpose.msra.mxu0 0.0
    %363 = vmatprep.subr.mxu0 0.0
    %364 = vmatpush1.xpose.msra.mxu0 0.0
    %365 = vmatprep.subr.mxu0 0.0
    %366 = vmatpush1.xpose.msra.mxu0 0.0
    %367 = vmatprep.subr.mxu0 0.0
    %368 = vmatpush1.xpose.msra.mxu0 0.0
    %369 = vmatprep.subr.mxu0 0.0
    %370 = vmatpush1.xpose.msra.mxu0 0.0
    %371 = vmatprep.subr.mxu0 0.0
    %372 = vmatpush1.xpose.msra.mxu0 0.0
    %373 = vmatprep.subr.mxu0 0.0
    %374 = vmatpush1.xpose.msra.mxu0 0.0
    %375 = vmatprep.subr.mxu0 0.0
    %376 = vmatpush1.xpose.msra.mxu0 0.0
    %377 = vmatprep.subr.mxu0 0.0
    %378 = vmatpush1.xpose.msra.mxu0 0.0
    %379 = vmatprep.subr.mxu0 0.0
    %380 = vmatpush1.xpose.msra.mxu0 0.0
    %381 = vmatprep.subr.mxu0 0.0
    %382 = vmatpush1.xpose.msra.mxu0 0.0
    %383 = vmatprep.subr.mxu0 0.0
    %384 = vmatpush1.xpose.msra.mxu0 0.0
    %385 = vmatprep.subr.mxu0 0.0
    %386 = vmatpush1.xpose.msra.mxu0 0.0
    %387 = vmatprep.subr.mxu0 0.0
    %388 = vmatpush1.xpose.msra.mxu0 0.0
    %389 = vmatprep.subr.mxu0 0.0
    %390 = vmatpush1.xpose.msra.mxu0 0.0
    %391 = vmatprep.subr.mxu0 0.0
    %392 = vmatpush1.xpose.msra.mxu0 0.0
    %393 = vmatprep.subr.mxu0 0.0
    %394 = vmatpush1.xpose.msra.mxu0 0.0
    %395 = vmatprep.mubr.f32.mxu0 0.0
    %396 = vmatmul.mubr.f32.gmra.mrb[0].mxu0 %v326
    %v397 = vpop.f32.mrb[0].mxu0
    %v398 = vadd.f32 0.0, %v397
    %v399 = vpop.f32.mrb[0].mxu0
    %400 = vdwg.mxu0
    %vm401 = vcmask 57344
    %v402 = vsel %vm401, %v323, -inf
    %403 = vmax.xlane.f32.xlu0 %v402
    %v404 = vpop.xlane.xlu0 %403
    %v405 = vsel %vm401, %v398, -inf
    %406 = vmax.xlane.f32.xlu0 %v405
    %v407 = vpop.xlane.xlu0 %406
    %v408 = vsub.f32 %v323, %v404
    %v409 = vsub.f32 %v398, %v407
    %v410 = vmul.f32 %v408, 1.442695
    %v411 = vpow.pop %v410
    %v412 = vmul.f32 %v409, 1.442695
    %v413 = vpow.pop %v412
    %v414 = vsel %vm401, %v411, 0.0
    %415 = vadd.xlane.f32.xlu0 %v414
    %v416 = vpop.xlane.xlu0 %415
    %v417 = vsel %vm401, %v413, 0.0
    %418 = vadd.xlane.f32.xlu0 %v417
    %v419 = vpop.xlane.xlu0 %418
    %v420 = vrcp.pop %v416
    %v421 = vmul.f32 1.0, %v420
    %v422 = vrcp.pop %v419
    %v423 = vmul.f32 1.0, %v422
    %v424 = vmul.f32 %v411, %v421
    %v425 = vmul.f32 %v413, %v423
    %vm426 = vcmask 64512
    %v428 = vsel %vm426, %v424, 0
    %430 = vmatprep.subr.mxu0 0.0
    %431 = vmatpush1.msra.mxu0 %v43
    %432 = vmatprep.subr.mxu0 0.0
    %433 = vmatpush1.msra.mxu0 0.0
    %434 = vmatprep.subr.mxu0 0.0
    %435 = vmatpush1.msra.mxu0 0.0
    %436 = vmatprep.subr.mxu0 0.0
    %437 = vmatpush1.msra.mxu0 0.0
    %438 = vmatprep.subr.mxu0 0.0
    %439 = vmatpush1.msra.mxu0 0.0
    %440 = vmatprep.subr.mxu0 0.0
    %441 = vmatpush1.msra.mxu0 0.0
    %442 = vmatprep.subr.mxu0 0.0
    %443 = vmatpush1.msra.mxu0 0.0
    %444 = vmatprep.subr.mxu0 0.0
    %445 = vmatpush1.msra.mxu0 0.0
    %446 = vmatprep.subr.mxu0 0.0
    %447 = vmatpush1.msra.mxu0 0.0
    %448 = vmatprep.subr.mxu0 0.0
    %449 = vmatpush1.msra.mxu0 0.0
    %450 = vmatprep.subr.mxu0 0.0
    %451 = vmatpush1.msra.mxu0 0.0
    %452 = vmatprep.subr.mxu0 0.0
    %453 = vmatpush1.msra.mxu0 0.0
    %454 = vmatprep.subr.mxu0 0.0
    %455 = vmatpush1.msra.mxu0 0.0
    %456 = vmatprep.subr.mxu0 0.0
    %457 = vmatpush1.msra.mxu0 0.0
    %458 = vmatprep.subr.mxu0 0.0
    %459 = vmatpush1.msra.mxu0 0.0
    %460 = vmatprep.subr.mxu0 0.0
    %461 = vmatpush1.msra.mxu0 0.0
    %462 = vmatprep.subr.mxu0 0.0
    %463 = vmatpush1.msra.mxu0 0.0
    %464 = vmatprep.subr.mxu0 0.0
    %465 = vmatpush1.msra.mxu0 0.0
    %466 = vmatprep.subr.mxu0 0.0
    %467 = vmatpush1.msra.mxu0 0.0
    %468 = vmatprep.subr.mxu0 0.0
    %469 = vmatpush1.msra.mxu0 0.0
    %470 = vmatprep.subr.mxu0 0.0
    %471 = vmatpush1.msra.mxu0 0.0
    %472 = vmatprep.subr.mxu0 0.0
    %473 = vmatpush1.msra.mxu0 0.0
    %474 = vmatprep.subr.mxu0 0.0
    %475 = vmatpush1.msra.mxu0 0.0
    %476 = vmatprep.subr.mxu0 0.0
    %477 = vmatpush1.msra.mxu0 0.0
    %478 = vmatprep.subr.mxu0 0.0
    %479 = vmatpush1.msra.mxu0 0.0
    %480 = vmatprep.subr.mxu0 0.0
    %481 = vmatpush1.msra.mxu0 0.0
    %482 = vmatprep.subr.mxu0 0.0
    %483 = vmatpush1.msra.mxu0 0.0
    %484 = vmatprep.subr.mxu0 0.0
    %485 = vmatpush1.msra.mxu0 0.0
    %486 = vmatprep.subr.mxu0 0.0
    %487 = vmatpush1.msra.mxu0 0.0
    %488 = vmatprep.subr.mxu0 0.0
    %489 = vmatpush1.msra.mxu0 0.0
    %490 = vmatprep.subr.mxu0 0.0
    %491 = vmatpush1.msra.mxu0 0.0
    %492 = vmatprep.subr.mxu0 0.0
    %493 = vmatpush1.msra.mxu0 0.0
    %494 = vmatprep.mubr.f32.mxu0 0.0
    %495 = vmatmul.mubr.f32.gmra.mrb[0].mxu0 %v428
    %v496 = vpop.f32.mrb[0].mxu0
    %v497 = vadd.f32 0.0, %v496
    %v498 = vpop.f32.mrb[0].mxu0
    %499 = vdwg.mxu0
    %v501 = vsel %vm426, %v425, 0
    %503 = vmatprep.subr.mxu0 0.0
    %504 = vmatpush1.msra.mxu0 %v44
    %505 = vmatprep.subr.mxu0 0.0
    %506 = vmatpush1.msra.mxu0 0.0
    %507 = vmatprep.subr.mxu0 0.0
    %508 = vmatpush1.msra.mxu0 0.0
    %509 = vmatprep.subr.mxu0 0.0
    %510 = vmatpush1.msra.mxu0 0.0
    %511 = vmatprep.subr.mxu0 0.0
    %512 = vmatpush1.msra.mxu0 0.0
    %513 = vmatprep.subr.mxu0 0.0
    %514 = vmatpush1.msra.mxu0 0.0
    %515 = vmatprep.subr.mxu0 0.0
    %516 = vmatpush1.msra.mxu0 0.0
    %517 = vmatprep.subr.mxu0 0.0
    %518 = vmatpush1.msra.mxu0 0.0
    %519 = vmatprep.subr.mxu0 0.0
    %520 = vmatpush1.msra.mxu0 0.0
    %521 = vmatprep.subr.mxu0 0.0
    %522 = vmatpush1.msra.mxu0 0.0
    %523 = vmatprep.subr.mxu0 0.0
    %524 = vmatpush1.msra.mxu0 0.0
    %525 = vmatprep.subr.mxu0 0.0
    %526 = vmatpush1.msra.mxu0 0.0
    %527 = vmatprep.subr.mxu0 0.0
    %528 = vmatpush1.msra.mxu0 0.0
    %529 = vmatprep.subr.mxu0 0.0
    %530 = vmatpush1.msra.mxu0 0.0
    %531 = vmatprep.subr.mxu0 0.0
    %532 = vmatpush1.msra.mxu0 0.0
    %533 = vmatprep.subr.mxu0 0.0
    %534 = vmatpush1.msra.mxu0 0.0
    %535 = vmatprep.subr.mxu0 0.0
    %536 = vmatpush1.msra.mxu0 0.0
    %537 = vmatprep.subr.mxu0 0.0
    %538 = vmatpush1.msra.mxu0 0.0
    %539 = vmatprep.subr.mxu0 0.0
    %540 = vmatpush1.msra.mxu0 0.0
    %541 = vmatprep.subr.mxu0 0.0
    %542 = vmatpush1.msra.mxu0 0.0
    %543 = vmatprep.subr.mxu0 0.0
    %544 = vmatpush1.msra.mxu0 0.0
    %545 = vmatprep.subr.mxu0 0.0
    %546 = vmatpush1.msra.mxu0 0.0
    %547 = vmatprep.subr.mxu0 0.0
    %548 = vmatpush1.msra.mxu0 0.0
    %549 = vmatprep.subr.mxu0 0.0
    %550 = vmatpush1.msra.mxu0 0.0
    %551 = vmatprep.subr.mxu0 0.0
    %552 = vmatpush1.msra.mxu0 0.0
    %553 = vmatprep.subr.mxu0 0.0
    %554 = vmatpush1.msra.mxu0 0.0
    %555 = vmatprep.subr.mxu0 0.0
    %556 = vmatpush1.msra.mxu0 0.0
    %557 = vmatprep.subr.mxu0 0.0
    %558 = vmatpush1.msra.mxu0 0.0
    %559 = vmatprep.subr.mxu0 0.0
    %560 = vmatpush1.msra.mxu0 0.0
    %561 = vmatprep.subr.mxu0 0.0
    %562 = vmatpush1.msra.mxu0 0.0
    %563 = vmatprep.subr.mxu0 0.0
    %564 = vmatpush1.msra.mxu0 0.0
    %565 = vmatprep.subr.mxu0 0.0
    %566 = vmatpush1.msra.mxu0 0.0
    %567 = vmatprep.mubr.f32.mxu0 0.0
    %568 = vmatmul.mubr.f32.gmra.mrb[0].mxu0 %v501
    %v569 = vpop.f32.mrb[0].mxu0
    %v570 = vadd.f32 0.0, %v569
    %v571 = vpop.f32.mrb[0].mxu0
    %572 = vdwg.mxu0
    %v573 = vld [vmem:[%s6] sm:$0xff]
    %v574 = vld [vmem:[%s6 + $0x8] sm:$0xff]
    %v575 = vld [vmem:[%s6 + $0x10] sm:$0xff]
    %v576 = vld [vmem:[%s6 + $0x18] sm:$0xff]
    %v577 = vld [vmem:[%s7] sm:$0xff]
    %v578 = vld [vmem:[%s7 + $0x8] sm:$0xff]
    %v579 = vld [vmem:[%s7 + $0x10] sm:$0xff]
    %v580 = vld [vmem:[%s7 + $0x18] sm:$0xff]
    %v583 = vrot.slane %v570, 7
    %vm584 = vcmask 1041409
    %v585 = vsel %vm584, %v583, %v497
    %v586 = vsel %vm56, %v585, 0
    %588 = vmatprep.subr.mxu0 0.0
    %589 = vmatpush1.msra.mxu0 %v577
    %590 = vmatprep.subr.mxu0 0.0
    %591 = vmatpush1.msra.mxu0 %v578
    %592 = vmatprep.subr.mxu0 0.0
    %593 = vmatpush1.msra.mxu0 %v579
    %594 = vmatprep.subr.mxu0 0.0
    %595 = vmatpush1.msra.mxu0 %v580
    %596 = vmatprep.subr.mxu0 0.0
    %597 = vmatpush1.msra.mxu0 0.0
    %598 = vmatprep.subr.mxu0 0.0
    %599 = vmatpush1.msra.mxu0 0.0
    %600 = vmatprep.subr.mxu0 0.0
    %601 = vmatpush1.msra.mxu0 0.0
    %602 = vmatprep.subr.mxu0 0.0
    %603 = vmatpush1.msra.mxu0 0.0
    %604 = vmatprep.subr.mxu0 0.0
    %605 = vmatpush1.msra.mxu0 0.0
    %606 = vmatprep.subr.mxu0 0.0
    %607 = vmatpush1.msra.mxu0 0.0
    %608 = vmatprep.subr.mxu0 0.0
    %609 = vmatpush1.msra.mxu0 0.0
    %610 = vmatprep.subr.mxu0 0.0
    %611 = vmatpush1.msra.mxu0 0.0
    %612 = vmatprep.subr.mxu0 0.0
    %613 = vmatpush1.msra.mxu0 0.0
    %614 = vmatprep.subr.mxu0 0.0
    %615 = vmatpush1.msra.mxu0 0.0
    %616 = vmatprep.subr.mxu0 0.0
    %617 = vmatpush1.msra.mxu0 0.0
    %618 = vmatprep.subr.mxu0 0.0
    %619 = vmatpush1.msra.mxu0 0.0
    %620 = vmatprep.subr.mxu0 0.0
    %621 = vmatpush1.msra.mxu0 0.0
    %622 = vmatprep.subr.mxu0 0.0
    %623 = vmatpush1.msra.mxu0 0.0
    %624 = vmatprep.subr.mxu0 0.0
    %625 = vmatpush1.msra.mxu0 0.0
    %626 = vmatprep.subr.mxu0 0.0
    %627 = vmatpush1.msra.mxu0 0.0
    %628 = vmatprep.subr.mxu0 0.0
    %629 = vmatpush1.msra.mxu0 0.0
    %630 = vmatprep.subr.mxu0 0.0
    %631 = vmatpush1.msra.mxu0 0.0
    %632 = vmatprep.subr.mxu0 0.0
    %633 = vmatpush1.msra.mxu0 0.0
    %634 = vmatprep.subr.mxu0 0.0
    %635 = vmatpush1.msra.mxu0 0.0
    %636 = vmatprep.subr.mxu0 0.0
    %637 = vmatpush1.msra.mxu0 0.0
    %638 = vmatprep.subr.mxu0 0.0
    %639 = vmatpush1.msra.mxu0 0.0
    %640 = vmatprep.subr.mxu0 0.0
    %641 = vmatpush1.msra.mxu0 0.0
    %642 = vmatprep.subr.mxu0 0.0
    %643 = vmatpush1.msra.mxu0 0.0
    %644 = vmatprep.subr.mxu0 0.0
    %645 = vmatpush1.msra.mxu0 0.0
    %646 = vmatprep.subr.mxu0 0.0
    %647 = vmatpush1.msra.mxu0 0.0
    %648 = vmatprep.subr.mxu0 0.0
    %649 = vmatpush1.msra.mxu0 0.0
    %650 = vmatprep.subr.mxu0 0.0
    %651 = vmatpush1.msra.mxu0 0.0
    %652 = vmatprep.mubr.f32.mxu0 0.0
    %653 = vmatmul.mubr.f32.gmra.mrb[0].mxu0 %v586
    %v654 = vpop.f32.mrb[0].mxu0
    %v655 = vadd.f32 0.0, %v654
    %v656 = vpop.f32.mrb[0].mxu0
    %657 = vdwg.mxu0
    %658 = vmatprep.subr.mxu0 0.0
    %659 = vmatpush1.msra.mxu0 %v573
    %660 = vmatprep.subr.mxu0 0.0
    %661 = vmatpush1.msra.mxu0 %v574
    %662 = vmatprep.subr.mxu0 0.0
    %663 = vmatpush1.msra.mxu0 %v575
    %664 = vmatprep.subr.mxu0 0.0
    %665 = vmatpush1.msra.mxu0 %v576
    %666 = vmatprep.subr.mxu0 0.0
    %667 = vmatpush1.msra.mxu0 0.0
    %668 = vmatprep.subr.mxu0 0.0
    %669 = vmatpush1.msra.mxu0 0.0
    %670 = vmatprep.subr.mxu0 0.0
    %671 = vmatpush1.msra.mxu0 0.0
    %672 = vmatprep.subr.mxu0 0.0
    %673 = vmatpush1.msra.mxu0 0.0
    %674 = vmatprep.subr.mxu0 0.0
    %675 = vmatpush1.msra.mxu0 0.0
    %676 = vmatprep.subr.mxu0 0.0
    %677 = vmatpush1.msra.mxu0 0.0
    %678 = vmatprep.subr.mxu0 0.0
    %679 = vmatpush1.msra.mxu0 0.0
    %680 = vmatprep.subr.mxu0 0.0
    %681 = vmatpush1.msra.mxu0 0.0
    %682 = vmatprep.subr.mxu0 0.0
    %683 = vmatpush1.msra.mxu0 0.0
    %684 = vmatprep.subr.mxu0 0.0
    %685 = vmatpush1.msra.mxu0 0.0
    %686 = vmatprep.subr.mxu0 0.0
    %687 = vmatpush1.msra.mxu0 0.0
    %688 = vmatprep.subr.mxu0 0.0
    %689 = vmatpush1.msra.mxu0 0.0
    %690 = vmatprep.subr.mxu0 0.0
    %691 = vmatpush1.msra.mxu0 0.0
    %692 = vmatprep.subr.mxu0 0.0
    %693 = vmatpush1.msra.mxu0 0.0
    %694 = vmatprep.subr.mxu0 0.0
    %695 = vmatpush1.msra.mxu0 0.0
    %696 = vmatprep.subr.mxu0 0.0
    %697 = vmatpush1.msra.mxu0 0.0
    %698 = vmatprep.subr.mxu0 0.0
    %699 = vmatpush1.msra.mxu0 0.0
    %700 = vmatprep.subr.mxu0 0.0
    %701 = vmatpush1.msra.mxu0 0.0
    %702 = vmatprep.subr.mxu0 0.0
    %703 = vmatpush1.msra.mxu0 0.0
    %704 = vmatprep.subr.mxu0 0.0
    %705 = vmatpush1.msra.mxu0 0.0
    %706 = vmatprep.subr.mxu0 0.0
    %707 = vmatpush1.msra.mxu0 0.0
    %708 = vmatprep.subr.mxu0 0.0
    %709 = vmatpush1.msra.mxu0 0.0
    %710 = vmatprep.subr.mxu0 0.0
    %711 = vmatpush1.msra.mxu0 0.0
    %712 = vmatprep.subr.mxu0 0.0
    %713 = vmatpush1.msra.mxu0 0.0
    %714 = vmatprep.subr.mxu0 0.0
    %715 = vmatpush1.msra.mxu0 0.0
    %716 = vmatprep.subr.mxu0 0.0
    %717 = vmatpush1.msra.mxu0 0.0
    %718 = vmatprep.subr.mxu0 0.0
    %719 = vmatpush1.msra.mxu0 0.0
    %720 = vmatprep.subr.mxu0 0.0
    %721 = vmatpush1.msra.mxu0 0.0
    %722 = vmatprep.mubr.f32.mxu0 0.0
    %723 = vmatmul.mubr.f32.gmra.mrb[0].mxu0 %v58
    %v724 = vpop.f32.mrb[0].mxu0
    %v725 = vadd.f32 %v655, %v724
    %v726 = vpop.f32.mrb[0].mxu0
    %727 = vdwg.mxu0
    %v728 = vld [vmem:[%s8] sm:$0x1]
    %v730 = vlaneseq
    %v731 = vshrl.u32 %v730, 7
    %v732 = vsub.s32 0, %v731
    %v733 = vrot.slane %v728, %v732
    %v735 = vadd.f32 %v725, %v733
    %vm736 = vcmp.gt.f32.partialorder %v735, 0.0
    %v737 = vmul.f32 %v735, 1.442695
    %v738 = vpow.pop %v737
    %v739 = vsub.f32 %v738, 1.0
    %v740 = vmul.f32 %v739, 1.6732632
    %v741 = vsel %vm736, %v735, %v740
    %v742 = vmul.f32 %v741, 1.050701
    %v743 = vld [vmem:[%s9] sm:$0xff]
    %v744 = vld [vmem:[%s9 + $0x8] sm:$0xff]
    %v745 = vld [vmem:[%s9 + $0x10] sm:$0xff]
    %v746 = vld [vmem:[%s9 + $0x18] sm:$0xff]
    %v747 = vld [vmem:[%s10] sm:$0x1]
    %v749 = vlaneseq
    %v750 = vshrl.u32 %v749, 7
    %v751 = vsub.s32 0, %v750
    %v752 = vrot.slane %v747, %v751
    %v755 = vsel %vm56, %v742, 0
    %757 = vmatprep.subr.mxu0 0.0
    %758 = vmatpush1.msra.mxu0 %v743
    %759 = vmatprep.subr.mxu0 0.0
    %760 = vmatpush1.msra.mxu0 %v744
    %761 = vmatprep.subr.mxu0 0.0
    %762 = vmatpush1.msra.mxu0 %v745
    %763 = vmatprep.subr.mxu0 0.0
    %764 = vmatpush1.msra.mxu0 %v746
    %765 = vmatprep.subr.mxu0 0.0
    %766 = vmatpush1.msra.mxu0 0.0
    %767 = vmatprep.subr.mxu0 0.0
    %768 = vmatpush1.msra.mxu0 0.0
    %769 = vmatprep.subr.mxu0 0.0
    %770 = vmatpush1.msra.mxu0 0.0
    %771 = vmatprep.subr.mxu0 0.0
    %772 = vmatpush1.msra.mxu0 0.0
    %773 = vmatprep.subr.mxu0 0.0
    %774 = vmatpush1.msra.mxu0 0.0
    %775 = vmatprep.subr.mxu0 0.0
    %776 = vmatpush1.msra.mxu0 0.0
    %777 = vmatprep.subr.mxu0 0.0
    %778 = vmatpush1.msra.mxu0 0.0
    %779 = vmatprep.subr.mxu0 0.0
    %780 = vmatpush1.msra.mxu0 0.0
    %781 = vmatprep.subr.mxu0 0.0
    %782 = vmatpush1.msra.mxu0 0.0
    %783 = vmatprep.subr.mxu0 0.0
    %784 = vmatpush1.msra.mxu0 0.0
    %785 = vmatprep.subr.mxu0 0.0
    %786 = vmatpush1.msra.mxu0 0.0
    %787 = vmatprep.subr.mxu0 0.0
    %788 = vmatpush1.msra.mxu0 0.0
    %789 = vmatprep.subr.mxu0 0.0
    %790 = vmatpush1.msra.mxu0 0.0
    %791 = vmatprep.subr.mxu0 0.0
    %792 = vmatpush1.msra.mxu0 0.0
    %793 = vmatprep.subr.mxu0 0.0
    %794 = vmatpush1.msra.mxu0 0.0
    %795 = vmatprep.subr.mxu0 0.0
    %796 = vmatpush1.msra.mxu0 0.0
    %797 = vmatprep.subr.mxu0 0.0
    %798 = vmatpush1.msra.mxu0 0.0
    %799 = vmatprep.subr.mxu0 0.0
    %800 = vmatpush1.msra.mxu0 0.0
    %801 = vmatprep.subr.mxu0 0.0
    %802 = vmatpush1.msra.mxu0 0.0
    %803 = vmatprep.subr.mxu0 0.0
    %804 = vmatpush1.msra.mxu0 0.0
    %805 = vmatprep.subr.mxu0 0.0
    %806 = vmatpush1.msra.mxu0 0.0
    %807 = vmatprep.subr.mxu0 0.0
    %808 = vmatpush1.msra.mxu0 0.0
    %809 = vmatprep.subr.mxu0 0.0
    %810 = vmatpush1.msra.mxu0 0.0
    %811 = vmatprep.subr.mxu0 0.0
    %812 = vmatpush1.msra.mxu0 0.0
    %813 = vmatprep.subr.mxu0 0.0
    %814 = vmatpush1.msra.mxu0 0.0
    %815 = vmatprep.subr.mxu0 0.0
    %816 = vmatpush1.msra.mxu0 0.0
    %817 = vmatprep.subr.mxu0 0.0
    %818 = vmatpush1.msra.mxu0 0.0
    %819 = vmatprep.subr.mxu0 0.0
    %820 = vmatpush1.msra.mxu0 0.0
    %821 = vmatprep.mubr.f32.mxu0 0.0
    %822 = vmatmul.mubr.f32.gmra.mrb[0].mxu0 %v755
    %v823 = vpop.f32.mrb[0].mxu0
    %v824 = vadd.f32 %v752, %v823
    %v825 = vpop.f32.mrb[0].mxu0
    %826 = vdwg.mxu0
    %vm827 = vcmp.gt.f32.partialorder %v824, 0.0
    %v828 = vmul.f32 %v824, 1.442695
    %v829 = vpow.pop %v828
    %v830 = vsub.f32 %v829, 1.0
    %v831 = vmul.f32 %v830, 1.6732632
    %v832 = vsel %vm827, %v824, %v831
    %v833 = vmul.f32 %v832, 1.050701
    %vm834 = vcmask 254976
    %835 = vst.msk [vmem:[#allocation2] sm:$0x3] %vm834, %v833
    %v836 = vrot.slane %v425, 7
    %v837 = vsel %vm584, %v836, %v424
    %vm839 = vcmask 58368
    %840 = vst.msk [vmem:[#allocation4] sm:$0x3] %vm839, %v837
    // Predicated region
    $region46: #{luong_gate_attention_forward.1} parent=1 // pred_check
      _
    $region47: #{luong_gate_attention_forward.1} parent=1 // pred_check_branch
      %842 = sbr.rel (0) target = $region49
    $region48: #{luong_gate_attention_forward.1} parent=1 // pred_region
      %s844 = ssub.s32 32, 32
      %845 = vsyncadd [#allocation3], %s844
      %s847 = sshll.u32 [#allocation2], 4
      %s848 = int_to_ptr.vmem [resolvable:$true] %s847
      %850 = dma.vmem_to_hbm [thread:$0]  %s848, 32, %s11, [#allocation3]
    $region49: #{luong_gate_attention_forward.1} parent=1 // pred_fallthru
      _
    // Predicated region
    $region50: #{luong_gate_attention_forward.1} parent=1 // pred_check
      _
    $region51: #{luong_gate_attention_forward.1} parent=1 // pred_check_branch
      %852 = sbr.rel (0) target = $region53
    $region52: #{luong_gate_attention_forward.1} parent=1 // pred_region
      %s854 = ssub.s32 32, 32
      %855 = vsyncadd [#allocation5], %s854
      %s857 = sshll.u32 [#allocation4], 4
      %s858 = int_to_ptr.vmem [resolvable:$true] %s857
      %860 = dma.vmem_to_hbm [thread:$0]  %s858, 32, %s12, [#allocation5]
    $region53: #{luong_gate_attention_forward.1} parent=1 // pred_fallthru
      _
    // Predicated region
    $region54: #{luong_gate_attention_forward.1} parent=1 // pred_check
      _
    $region55: #{luong_gate_attention_forward.1} parent=1 // pred_check_branch
      %862 = sbr.rel (0) target = $region57
    $region56: #{luong_gate_attention_forward.1} parent=1 // pred_region
      %863 = dma.done [#allocation3], 32
    $region57: #{luong_gate_attention_forward.1} parent=1 // pred_fallthru
      _
    // Predicated region
    $region58: #{luong_gate_attention_forward.1} parent=1 // pred_check
      _
    $region59: #{luong_gate_attention_forward.1} parent=1 // pred_check_branch
      %865 = sbr.rel (0) target = $region61
    $region60: #{luong_gate_attention_forward.1} parent=1 // pred_region
      %866 = dma.done [#allocation5], 32
    $region61: #{luong_gate_attention_forward.1} parent=1 // pred_fallthru
      _
    %867 = vsyncpa [#allocation3], 1
    %868 = vsyncpa [#allocation5], 1

</llo_original>
